<compile_context>
chip_gen: v5e
topology: v5e:2x2
jax: 0.10.0
libtpu: 0.0.40
codegen_flags: <defaults>
</compile_context>

<pallas_src>
import functools

import jax
import jax.numpy as jnp
from jax import lax
from jax.experimental import pallas as pl
from jax.experimental.pallas import tpu as pltpu


def _round_up(x, m):
    return (x + m - 1) // m * m


def _cdiv(a, b):
    return -(-a // b)


# --------------------------------------------------------------------------- #
# Kernel
# --------------------------------------------------------------------------- #
def _dist_linear_kernel(x_ref, v_ref, g_ref, o_ref, acc_ref, xsq_ref, vsq_ref,
                        *, scale_factor, eps):
    j = pl.program_id(1)          # class tile
    k = pl.program_id(2)          # K (feature) tile -- reduction axis, innermost
    nk = pl.num_programs(2)

    x = x_ref[...]                # (TM, TK) features, original dtype
    v = v_ref[...]                # (TN, TK) weight rows (PyTorch (C, D) layout)

    # ---- init accumulators ---------------------------------------------------
    @pl.when(k == 0)
    def _():
        acc_ref[...] = jnp.zeros_like(acc_ref)
        vsq_ref[...] = jnp.zeros_like(vsq_ref)

    @pl.when(jnp.logical_and(j == 0, k == 0))
    def _():
        xsq_ref[...] = jnp.zeros_like(xsq_ref)

    # ---- squared-norm accumulation in f32 (VPU/XLU, hidden behind the MXU) ---
    vf = v.astype(jnp.float32)
    vsq_ref[...] += jnp.sum(vf * vf, axis=-1, keepdims=True).T            # (1, TN)

    # x row norms are identical for every class tile j -> compute only at j == 0
    # and reuse from scratch for all other class tiles of this batch tile.
    @pl.when(j == 0)
    def _():
        xf = x.astype(jnp.float32)
        xsq_ref[...] += jnp.sum(xf * xf, axis=-1, keepdims=True)          # (TM, 1)

    # ---- MXU: bf16 operands, f32 accumulation --------------------------------
    acc_ref[...] += lax.dot_general(
        x.astype(jnp.bfloat16), v.astype(jnp.bfloat16),
        dimension_numbers=(((1,), (1,)), ((), ())),
        preferred_element_type=jnp.float32)                               # (TM, TN)

    # ---- finalize: fold both norms, g and scale_factor into rank-1 scalings --
    @pl.when(k == nk - 1)
    def _():
        g = g_ref[...].astype(jnp.float32)                                # (1, TN)
        # row_scale = scale_factor / (||x|| + eps)   (eps matches the PyTorch ref)
        row_scale = scale_factor * pl.reciprocal(
            jnp.sqrt(xsq_ref[...]) + eps, approx=True)                    # (TM, 1)
        # col_scale = g / ||v||;  zero-padded weight rows (||v|| = 0) -> 0.
        vsq = vsq_ref[...]                                                # (1, TN)
        col_scale = jnp.where(
            vsq > 0.0, g * lax.rsqrt(jnp.maximum(vsq, 1e-30)), 0.0)
        o_ref[...] = (acc_ref[...] * row_scale * col_scale).astype(o_ref.dtype)


# --------------------------------------------------------------------------- #
# Tile selection (VMEM-budgeted, chip-aware)
# --------------------------------------------------------------------------- #
_VMEM_BLOCK_BUDGET = 20 * 1024 * 1024      # blocks + scratch, under the 32 MiB limit we set


def _pick_tiles(B, C, D, itemsize):
    # N tile: 256 fills the 256-wide MXU on v6e/v7x; 128 on v5e and older.
    try:
        kind = jax.devices()[0].device_kind.lower()
    except Exception:
        kind = ""
    tn = 128 if any(s in kind for s in ("v2", "v3", "v4", "v5")) else 256
    tn = min(tn, max(128, _round_up(C, 128)))

    # M tile: bound padding waste for small/medium batches, large only for big B.
    if B <= 256:
        tm = _round_up(B, 16)
    elif B <= 2048:
        tm = 256
    else:
        tm = 512

    # K tile from an explicit VMEM budget (double-buffered x/v blocks + out + scratch).
    fixed = 3 * tm * tn * 4 + (tm + tn) * 128 * 4
    per_k = 2 * (tm + tn) * itemsize
    tk_cap = max((_VMEM_BLOCK_BUDGET - fixed) // per_k, 256)
    if D <= tk_cap:
        tk, nk = D, 1                      # full-K block; no 128-alignment needed
    else:
        nk = _cdiv(D, tk_cap)
        tk = _round_up(_cdiv(D, nk), 128)  # balanced K tiles, minimal overshoot
        nk = _cdiv(D, tk)
    return tm, tn, tk, nk


# --------------------------------------------------------------------------- #
# Wrapper
# --------------------------------------------------------------------------- #
def dist_linear(x, v, g, *, eps=1e-5):
    """distLinear forward.  x:(B,D) features, v:(C,D) weight directions (L.weight_v),
    g:(C,) WeightNorm gains (L.weight_g).  Returns (B, C) float32 scores."""
    B, D = x.shape
    C, D2 = v.shape
    assert D == D2 and g.shape == (C,)
    scale_factor = 2.0 if C <= 200 else 10.0

    itemsize = jnp.dtype(x.dtype).itemsize
    TM, TN, TK, nk = _pick_tiles(B, C, D, itemsize)

    M_pad = _round_up(B, TM)
    C_pad = _round_up(C, TN)
    D_pad = TK * nk                       # == D when nk == 1 (no K padding)

    # Host padding only where actually needed (C for lane-dense output tiles,
    # M for the batch tile, K only in the rare huge-indim multi-tile case).
    # TODO(synk): for huge indim not divisible by the K tile, the zero-pad copy
    # could be avoided with in-kernel masking of the last K block.
    x_p = x if (M_pad == B and D_pad == D) else jnp.pad(
        x, ((0, M_pad - B), (0, D_pad - D)))
    v_p = v if (C_pad == C and D_pad == D) else jnp.pad(
        v, ((0, C_pad - C), (0, D_pad - D)))
    g_p = g.reshape(1, C)
    if C_pad != C:
        g_p = jnp.pad(g_p, ((0, 0), (0, C_pad - C)))

    n_i, n_j = M_pad // TM, C_pad // TN
    grid = (n_i, n_j, nk)

    kernel = functools.partial(_dist_linear_kernel,
                               scale_factor=scale_factor, eps=eps)

    # Truthful HBM traffic: V is re-read once per batch tile; x is re-read once
    # per class tile only when K is tiled (otherwise its block stays resident).
    x_bytes = x_p.size * x_p.dtype.itemsize * (n_j if nk > 1 else 1)
    v_bytes = v_p.size * v_p.dtype.itemsize * n_i
    g_bytes = g_p.size * g_p.dtype.itemsize * n_i
    out_bytes = M_pad * C_pad * 4

    out = pl.pallas_call(
        kernel,
        out_shape=jax.ShapeDtypeStruct((M_pad, C_pad), jnp.float32),
        grid=grid,
        in_specs=[
            pl.BlockSpec((TM, TK), lambda i, j, k: (i, k)),   # x tile
            pl.BlockSpec((TN, TK), lambda i, j, k: (j, k)),   # weight-row tile
            pl.BlockSpec((1, TN), lambda i, j, k: (0, j)),    # gains tile
        ],
        out_specs=pl.BlockSpec((TM, TN), lambda i, j, k: (i, j)),
        scratch_shapes=[
            pltpu.VMEM((TM, TN), jnp.float32),                # f32 matmul accumulator
            pltpu.VMEM((TM, 1), jnp.float32),                 # sum(x^2) per row
            pltpu.VMEM((1, TN), jnp.float32),                 # sum(v^2) per class
        ],
        compiler_params=pltpu.CompilerParams(
            dimension_semantics=("parallel", "arbitrary", "arbitrary"),
            vmem_limit_bytes=32 * 1024 * 1024),
        cost_estimate=pl.CostEstimate(
            flops=2 * M_pad * C_pad * D_pad,
            transcendentals=n_i * n_j * (2 * TM + TN),
            bytes_accessed=x_bytes + v_bytes + g_bytes + out_bytes),
    )(x_p, v_p, g_p)
    return out[:B, :C]


# --------------------------------------------------------------------------- #
# Pure-JAX reference (mirrors the PyTorch module)
# --------------------------------------------------------------------------- #
def dist_linear_ref(x, v, g, eps=1e-5):
    scale_factor = 2.0 if v.shape[0] <= 200 else 10.0
    x_n = x / (jnp.linalg.norm(x, axis=1, keepdims=True) + eps)
    w = g[:, None] * v / jnp.linalg.norm(v, axis=1, keepdims=True)
    return scale_factor * (x_n @ w.T)


if __name__ == "__main__":
    B, indim, outdim = 16, 512, 200        # outdim <= 200 -> scale_factor = 2
    key = jax.random.PRNGKey(0)
    kx, kv = jax.random.split(key)

    x = jax.random.normal(kx, (B, indim), jnp.float32)
    v = jax.random.normal(kv, (outdim, indim), jnp.float32) * 0.05
    # WeightNorm initial state: g = per-row norm of the original weight.
    g = jnp.linalg.norm(v, axis=1)

    scores = jax.jit(dist_linear)(x, v, g)
    scores = jax.block_until_ready(scores)

    assert scores.shape == (B, outdim)
    assert bool(jnp.all(jnp.isfinite(scores)))
    ref = dist_linear_ref(x, v, g)
    max_err = float(jnp.max(jnp.abs(scores - ref)))
    # bf16 MXU operands with f32 accumulation -> slightly looser tolerance than f32.
    assert bool(jnp.allclose(scores, ref, rtol=1e-2, atol=1e-2)), f"max abs err {max_err}"
    print("KERNEL_OK")
</pallas_src>

<mosaic_0001>
module attributes {stable_mosaic.version = 11 : i64} {
  func.func @_dist_linear_kernel(%arg0: i32, %arg1: i32, %arg2: i32, %arg3: memref<16x512xf32, #tpu.memory_space<vmem>>, %arg4: memref<256x512xf32, #tpu.memory_space<vmem>>, %arg5: memref<1x256xf32, #tpu.memory_space<vmem>>, %arg6: memref<16x256xf32, #tpu.memory_space<vmem>>, %arg7: memref<16x256xf32, #tpu.memory_space<vmem>>, %arg8: memref<16x1xf32, #tpu.memory_space<vmem>>, %arg9: memref<1x256xf32, #tpu.memory_space<vmem>>) attributes {dimension_semantics = [#tpu.dimension_semantics<parallel>, #tpu.dimension_semantics<arbitrary>, #tpu.dimension_semantics<arbitrary>], iteration_bounds = array<i64: 1, 1, 1>, scalar_prefetch = 0 : i64, scratch_operands = 3 : i64, tpu.core_type = #tpu.core_type<tc>, window_params = [{transform_indices = @transform_0, window_bounds = array<i64: 16, 512>}, {transform_indices = @transform_1, window_bounds = array<i64: 256, 512>}, {transform_indices = @transform_2, window_bounds = array<i64: 1, 256>}, {transform_indices = @transform_3, window_bounds = array<i64: 16, 256>}]} {
    %c0 = arith.constant 0 : index
    %c0_0 = arith.constant 0 : index
    %0 = vector.load %arg3[%c0, %c0_0] : memref<16x512xf32, #tpu.memory_space<vmem>>, vector<16x512xf32>
    %c0_1 = arith.constant 0 : index
    %c0_2 = arith.constant 0 : index
    %1 = vector.load %arg4[%c0_1, %c0_2] : memref<256x512xf32, #tpu.memory_space<vmem>>, vector<256x512xf32>
    %c0_i32 = arith.constant 0 : i32
    %2 = arith.cmpi eq, %arg2, %c0_i32 : i32
    %3 = arith.extui %2 : i1 to i32
    %c0_i32_3 = arith.constant 0 : i32
    %4 = arith.cmpi ne, %3, %c0_i32_3 : i32
    scf.if %4 {
      %cst_20 = arith.constant 0.000000e+00 : f32
      %29 = vector.broadcast %cst_20 : f32 to vector<16x256xf32>
      %c0_21 = arith.constant 0 : index
      %c0_22 = arith.constant 0 : index
      %30 = vector.load %arg7[%c0_21, %c0_22] : memref<16x256xf32, #tpu.memory_space<vmem>>, vector<16x256xf32>
      tpu.vector_store %arg7[%c0_21, %c0_22], %29 {strides = array<i32>} : memref<16x256xf32, #tpu.memory_space<vmem>>, vector<16x256xf32>,
      %cst_23 = arith.constant 0.000000e+00 : f32
      %31 = vector.broadcast %cst_23 : f32 to vector<1x256xf32>
      %c0_24 = arith.constant 0 : index
      %c0_25 = arith.constant 0 : index
      %32 = vector.load %arg9[%c0_24, %c0_25] : memref<1x256xf32, #tpu.memory_space<vmem>>, vector<1x256xf32>
      tpu.vector_store %arg9[%c0_24, %c0_25], %31 {strides = array<i32>} : memref<1x256xf32, #tpu.memory_space<vmem>>, vector<1x256xf32>,
    } else {
    }
    %c0_i32_4 = arith.constant 0 : i32
    %5 = arith.cmpi eq, %arg1, %c0_i32_4 : i32
    %c0_i32_5 = arith.constant 0 : i32
    %6 = arith.cmpi eq, %arg2, %c0_i32_5 : i32
    %7 = arith.andi %5, %6 : i1
    %8 = arith.extui %7 : i1 to i32
    %c0_i32_6 = arith.constant 0 : i32
    %9 = arith.cmpi ne, %8, %c0_i32_6 : i32
    scf.if %9 {
      %cst_20 = arith.constant 0.000000e+00 : f32
      %29 = vector.broadcast %cst_20 : f32 to vector<16x1xf32>
      %c0_21 = arith.constant 0 : index
      %c0_22 = arith.constant 0 : index
      %30 = vector.load %arg8[%c0_21, %c0_22] : memref<16x1xf32, #tpu.memory_space<vmem>>, vector<16x1xf32>
      tpu.vector_store %arg8[%c0_21, %c0_22], %29 {strides = array<i32>} : memref<16x1xf32, #tpu.memory_space<vmem>>, vector<16x1xf32>,
    } else {
    }
    %c0_7 = arith.constant 0 : index
    %c0_8 = arith.constant 0 : index
    %10 = vector.load %arg9[%c0_7, %c0_8] : memref<1x256xf32, #tpu.memory_space<vmem>>, vector<1x256xf32>
    %11 = arith.mulf %1, %1 : vector<256x512xf32>
    %cst = arith.constant dense<0.000000e+00> : vector<256xf32>
    %12 = vector.multi_reduction <add>, %11, %cst [1] : vector<256x512xf32> to vector<256xf32>
    %13 = vector.shape_cast %12 : vector<256xf32> to vector<256x1xf32>
    %14 = tpu.transpose %13, [1, 0] : vector<256x1xf32> -> vector<1x256xf32>
    %15 = arith.addf %10, %14 : vector<1x256xf32>
    %c0_9 = arith.constant 0 : index
    %c0_10 = arith.constant 0 : index
    %16 = vector.load %arg9[%c0_9, %c0_10] : memref<1x256xf32, #tpu.memory_space<vmem>>, vector<1x256xf32>
    tpu.vector_store %arg9[%c0_9, %c0_10], %15 {strides = array<i32>} : memref<1x256xf32, #tpu.memory_space<vmem>>, vector<1x256xf32>,
    %c0_i32_11 = arith.constant 0 : i32
    %17 = arith.cmpi eq, %arg1, %c0_i32_11 : i32
    %18 = arith.extui %17 : i1 to i32
    %c0_i32_12 = arith.constant 0 : i32
    %19 = arith.cmpi ne, %18, %c0_i32_12 : i32
    scf.if %19 {
      %c0_20 = arith.constant 0 : index
      %c0_21 = arith.constant 0 : index
      %29 = vector.load %arg8[%c0_20, %c0_21] : memref<16x1xf32, #tpu.memory_space<vmem>>, vector<16x1xf32>
      %30 = arith.mulf %0, %0 : vector<16x512xf32>
      %cst_22 = arith.constant dense<0.000000e+00> : vector<16xf32>
      %31 = vector.multi_reduction <add>, %30, %cst_22 [1] : vector<16x512xf32> to vector<16xf32>
      %32 = vector.shape_cast %31 : vector<16xf32> to vector<16x1xf32>
      %33 = arith.addf %29, %32 : vector<16x1xf32>
      %c0_23 = arith.constant 0 : index
      %c0_24 = arith.constant 0 : index
      %34 = vector.load %arg8[%c0_23, %c0_24] : memref<16x1xf32, #tpu.memory_space<vmem>>, vector<16x1xf32>
      tpu.vector_store %arg8[%c0_23, %c0_24], %33 {strides = array<i32>} : memref<16x1xf32, #tpu.memory_space<vmem>>, vector<16x1xf32>,
    } else {
    }
    %c0_13 = arith.constant 0 : index
    %c0_14 = arith.constant 0 : index
    %20 = vector.load %arg7[%c0_13, %c0_14] : memref<16x256xf32, #tpu.memory_space<vmem>>, vector<16x256xf32>
    %21 = arith.truncf %0 : vector<16x512xf32> to vector<16x512xbf16>
    %22 = arith.truncf %1 : vector<256x512xf32> to vector<256x512xbf16>
    %cst_15 = arith.constant dense<0.000000e+00> : vector<16x256xf32>
    %23 = tpu.matmul %21, %22, %cst_15 {dimension_numbers = #tpu.dot_dimension_numbers<[1], [1], [0], [0], [0, 0, 1, 0], [], []>} : vector<16x512xbf16>, vector<256x512xbf16>, vector<16x256xf32> -> vector<16x256xf32>
    %24 = arith.addf %20, %23 : vector<16x256xf32>
    %c0_16 = arith.constant 0 : index
    %c0_17 = arith.constant 0 : index
    %25 = vector.load %arg7[%c0_16, %c0_17] : memref<16x256xf32, #tpu.memory_space<vmem>>, vector<16x256xf32>
    tpu.vector_store %arg7[%c0_16, %c0_17], %24 {strides = array<i32>} : memref<16x256xf32, #tpu.memory_space<vmem>>, vector<16x256xf32>,
    %c0_i32_18 = arith.constant 0 : i32
    %26 = arith.cmpi eq, %arg2, %c0_i32_18 : i32
    %27 = arith.extui %26 : i1 to i32
    %c0_i32_19 = arith.constant 0 : i32
    %28 = arith.cmpi ne, %27, %c0_i32_19 : i32
    scf.if %28 {
      %c0_20 = arith.constant 0 : index
      %c0_21 = arith.constant 0 : index
      %29 = vector.load %arg5[%c0_20, %c0_21] : memref<1x256xf32, #tpu.memory_space<vmem>>, vector<1x256xf32>
      %c0_22 = arith.constant 0 : index
      %c0_23 = arith.constant 0 : index
      %30 = vector.load %arg8[%c0_22, %c0_23] : memref<16x1xf32, #tpu.memory_space<vmem>>, vector<16x1xf32>
      %31 = math.sqrt %30 : vector<16x1xf32>
      %cst_24 = arith.constant 9.99999974E-6 : f32
      %32 = vector.broadcast %cst_24 : f32 to vector<16x1xf32>
      %33 = arith.addf %31, %32 : vector<16x1xf32>
      %34 = tpu.reciprocal %33 {approx = true} : vector<16x1xf32> -> vector<16x1xf32>
      %cst_25 = arith.constant 2.000000e+00 : f32
      %35 = vector.broadcast %cst_25 : f32 to vector<16x1xf32>
      %36 = arith.mulf %35, %34 : vector<16x1xf32>
      %c0_26 = arith.constant 0 : index
      %c0_27 = arith.constant 0 : index
      %37 = vector.load %arg9[%c0_26, %c0_27] : memref<1x256xf32, #tpu.memory_space<vmem>>, vector<1x256xf32>
      %cst_28 = arith.constant 0.000000e+00 : f32
      %38 = vector.broadcast %cst_28 : f32 to vector<1x256xf32>
      %39 = arith.cmpf ogt, %37, %38 : vector<1x256xf32>
      %cst_29 = arith.constant 1.000000e-30 : f32
      %40 = vector.broadcast %cst_29 : f32 to vector<1x256xf32>
      %41 = arith.maximumf %37, %40 : vector<1x256xf32>
      %42 = math.rsqrt %41 : vector<1x256xf32>
      %43 = arith.mulf %29, %42 : vector<1x256xf32>
      %cst_30 = arith.constant 0.000000e+00 : f32
      %44 = vector.broadcast %cst_30 : f32 to vector<1x256xf32>
      %45 = arith.select %39, %43, %44 : vector<1x256xi1>, vector<1x256xf32>
      %c0_31 = arith.constant 0 : index
      %c0_32 = arith.constant 0 : index
      %46 = vector.load %arg7[%c0_31, %c0_32] : memref<16x256xf32, #tpu.memory_space<vmem>>, vector<16x256xf32>
      %47 = vector.broadcast %36 : vector<16x1xf32> to vector<16x256xf32>
      %48 = arith.mulf %46, %47 : vector<16x256xf32>
      %49 = vector.broadcast %45 : vector<1x256xf32> to vector<16x256xf32>
      %50 = arith.mulf %48, %49 : vector<16x256xf32>
      %c0_33 = arith.constant 0 : index
      %c0_34 = arith.constant 0 : index
      %51 = vector.load %arg6[%c0_33, %c0_34] : memref<16x256xf32, #tpu.memory_space<vmem>>, vector<16x256xf32>
      tpu.vector_store %arg6[%c0_33, %c0_34], %50 {strides = array<i32>} : memref<16x256xf32, #tpu.memory_space<vmem>>, vector<16x256xf32>,
    } else {
    }
    return
  }
  func.func @transform_0(%arg0: i32, %arg1: i32, %arg2: i32) -> (i32, i32) {
    %c0_i32 = arith.constant 0 : i32
    return %arg0, %arg2 : i32, i32
  }
  func.func @transform_1(%arg0: i32, %arg1: i32, %arg2: i32) -> (i32, i32) {
    %c0_i32 = arith.constant 0 : i32
    return %arg1, %arg2 : i32, i32
  }
  func.func @transform_2(%arg0: i32, %arg1: i32, %arg2: i32) -> (i32, i32) {
    %c0_i32 = arith.constant 0 : i32
    %c0_i32_0 = arith.constant 0 : i32
    return %c0_i32, %arg1 : i32, i32
  }
  func.func @transform_3(%arg0: i32, %arg1: i32, %arg2: i32) -> (i32, i32) {
    %c0_i32 = arith.constant 0 : i32
    return %arg0, %arg1 : i32, i32
  }
}

</mosaic_0001>

<llo_original>
// kernel: dist_linear.1
$region0: #{dist_linear.1}
  #allocation0 [shape = 'u32[]', space=smem, size = 0x4, offset = 0x4, fixed_abs, tag = 'smem constant byte address 0x4 - core index']
  #allocation1 [shape = 'u32[72,128]{1,0:T(1,128)}', space=vmem, size = 0x9000, scoped, tag = 'internal scratch']
  #allocation2 [shape = 'f32[16,256]{1,0:T(8,128)}', space=vmem, size = 0x4000, scoped, tag = 'scratch operand']
  #allocation3 [shape = 'f32[16,1]{1,0:T(8,128)}', space=vmem, size = 0x2000, scoped, tag = 'scratch operand']
  #allocation4 [shape = 'f32[1,256]{1,0:T(1,128)}', space=vmem, size = 0x400, scoped, tag = 'scratch operand']
  %s0 = inlined_call_operand.vmem [shape: f32[16,512], index: 0, kind: input, shape index: {}]
  %s1 = inlined_call_operand.vmem [shape: f32[256,512], index: 1, kind: input, shape index: {}]
  %s2 = inlined_call_operand.vmem [shape: f32[1,256], index: 2, kind: input, shape index: {}]
  %s3 = inlined_call_operand.hbm [shape: f32[16,256], index: 3, kind: output, shape index: {}]
  %s4 = sld [smem:[#allocation0]]
  $region38: #{dist_linear.1} parent=0
    _
  %s6 = ssub.s32 1, %s4
  %s7 = scalar_select 0, %s6, %s4
  $region1: #{dist_linear.1} parent=0
    #allocation5 [shape = 'u8[16384]{0}', space=vmem, size = 0x4000, scoped, tag = 'output window, operand 0, single buffered']
    #allocation6 [shape = 's32[1]{0}', space=sflag, size = 0x4, scoped, tag = 'scoped memory for dist_linear.1']
    %8 = vsyncpa [#allocation6], 0
    // Predicated region
    $region2: #{dist_linear.1} parent=1 // pred_check
      _
    $region3: #{dist_linear.1} parent=1 // pred_check_branch
      %10 = sbr.rel (0) target = $region5
    $region4: #{dist_linear.1} parent=1 // pred_region
      _
    $region5: #{dist_linear.1} parent=1 // pred_fallthru
      _
    // Predicated region
    $region6: #{dist_linear.1} parent=1 // pred_check
      _
    $region7: #{dist_linear.1} parent=1 // pred_check_branch
      %12 = sbr.rel (0) target = $region9
    $region8: #{dist_linear.1} parent=1 // pred_region
      _
    $region9: #{dist_linear.1} parent=1 // pred_fallthru
      _
    // Predicated region
    $region10: #{dist_linear.1} parent=1 // pred_check
      _
    $region11: #{dist_linear.1} parent=1 // pred_check_branch
      %14 = sbr.rel (0) target = $region13
    $region12: #{dist_linear.1} parent=1 // pred_region
      _
    $region13: #{dist_linear.1} parent=1 // pred_fallthru
      _
    %v15 = vld [vmem:[%s0] sm:$0xff]
    %v16 = vld [vmem:[%s0 + $0x8] sm:$0xff]
    %v17 = vld [vmem:[%s0 + $0x10] sm:$0xff]
    %v18 = vld [vmem:[%s0 + $0x18] sm:$0xff]
    %v19 = vld [vmem:[%s0 + $0x20] sm:$0xff]
    %v20 = vld [vmem:[%s0 + $0x28] sm:$0xff]
    %v21 = vld [vmem:[%s0 + $0x30] sm:$0xff]
    %v22 = vld [vmem:[%s0 + $0x38] sm:$0xff]
    %v23 = vld [vmem:[%s1] sm:$0xff]
    %v24 = vld [vmem:[%s1 + $0x8] sm:$0xff]
    %v25 = vld [vmem:[%s1 + $0x10] sm:$0xff]
    %v26 = vld [vmem:[%s1 + $0x18] sm:$0xff]
    %v27 = vld [vmem:[%s1 + $0x20] sm:$0xff]
    %v28 = vld [vmem:[%s1 + $0x28] sm:$0xff]
    %v29 = vld [vmem:[%s1 + $0x30] sm:$0xff]
    %v30 = vld [vmem:[%s1 + $0x38] sm:$0xff]
    %v31 = vld [vmem:[%s1 + $0x40] sm:$0xff]
    %v32 = vld [vmem:[%s1 + $0x48] sm:$0xff]
    %v33 = vld [vmem:[%s1 + $0x50] sm:$0xff]
    %v34 = vld [vmem:[%s1 + $0x58] sm:$0xff]
    %v35 = vld [vmem:[%s1 + $0x60] sm:$0xff]
    %v36 = vld [vmem:[%s1 + $0x68] sm:$0xff]
    %v37 = vld [vmem:[%s1 + $0x70] sm:$0xff]
    %v38 = vld [vmem:[%s1 + $0x78] sm:$0xff]
    %v39 = vld [vmem:[%s1 + $0x80] sm:$0xff]
    %v40 = vld [vmem:[%s1 + $0x88] sm:$0xff]
    %v41 = vld [vmem:[%s1 + $0x90] sm:$0xff]
    %v42 = vld [vmem:[%s1 + $0x98] sm:$0xff]
    %v43 = vld [vmem:[%s1 + $0xa0] sm:$0xff]
    %v44 = vld [vmem:[%s1 + $0xa8] sm:$0xff]
    %v45 = vld [vmem:[%s1 + $0xb0] sm:$0xff]
    %v46 = vld [vmem:[%s1 + $0xb8] sm:$0xff]
    %v47 = vld [vmem:[%s1 + $0xc0] sm:$0xff]
    %v48 = vld [vmem:[%s1 + $0xc8] sm:$0xff]
    %v49 = vld [vmem:[%s1 + $0xd0] sm:$0xff]
    %v50 = vld [vmem:[%s1 + $0xd8] sm:$0xff]
    %v51 = vld [vmem:[%s1 + $0xe0] sm:$0xff]
    %v52 = vld [vmem:[%s1 + $0xe8] sm:$0xff]
    %v53 = vld [vmem:[%s1 + $0xf0] sm:$0xff]
    %v54 = vld [vmem:[%s1 + $0xf8] sm:$0xff]
    %v55 = vld [vmem:[%s1 + $0x100] sm:$0xff]
    %v56 = vld [vmem:[%s1 + $0x108] sm:$0xff]
    %v57 = vld [vmem:[%s1 + $0x110] sm:$0xff]
    %v58 = vld [vmem:[%s1 + $0x118] sm:$0xff]
    %v59 = vld [vmem:[%s1 + $0x120] sm:$0xff]
    %v60 = vld [vmem:[%s1 + $0x128] sm:$0xff]
    %v61 = vld [vmem:[%s1 + $0x130] sm:$0xff]
    %v62 = vld [vmem:[%s1 + $0x138] sm:$0xff]
    %v63 = vld [vmem:[%s1 + $0x140] sm:$0xff]
    %v64 = vld [vmem:[%s1 + $0x148] sm:$0xff]
    %v65 = vld [vmem:[%s1 + $0x150] sm:$0xff]
    %v66 = vld [vmem:[%s1 + $0x158] sm:$0xff]
    %v67 = vld [vmem:[%s1 + $0x160] sm:$0xff]
    %v68 = vld [vmem:[%s1 + $0x168] sm:$0xff]
    %v69 = vld [vmem:[%s1 + $0x170] sm:$0xff]
    %v70 = vld [vmem:[%s1 + $0x178] sm:$0xff]
    %v71 = vld [vmem:[%s1 + $0x180] sm:$0xff]
    %v72 = vld [vmem:[%s1 + $0x188] sm:$0xff]
    %v73 = vld [vmem:[%s1 + $0x190] sm:$0xff]
    %v74 = vld [vmem:[%s1 + $0x198] sm:$0xff]
    %v75 = vld [vmem:[%s1 + $0x1a0] sm:$0xff]
    %v76 = vld [vmem:[%s1 + $0x1a8] sm:$0xff]
    %v77 = vld [vmem:[%s1 + $0x1b0] sm:$0xff]
    %v78 = vld [vmem:[%s1 + $0x1b8] sm:$0xff]
    %v79 = vld [vmem:[%s1 + $0x1c0] sm:$0xff]
    %v80 = vld [vmem:[%s1 + $0x1c8] sm:$0xff]
    %v81 = vld [vmem:[%s1 + $0x1d0] sm:$0xff]
    %v82 = vld [vmem:[%s1 + $0x1d8] sm:$0xff]
    %v83 = vld [vmem:[%s1 + $0x1e0] sm:$0xff]
    %v84 = vld [vmem:[%s1 + $0x1e8] sm:$0xff]
    %v85 = vld [vmem:[%s1 + $0x1f0] sm:$0xff]
    %v86 = vld [vmem:[%s1 + $0x1f8] sm:$0xff]
    %v87 = vld [vmem:[%s1 + $0x200] sm:$0xff]
    %v88 = vld [vmem:[%s1 + $0x208] sm:$0xff]
    %v89 = vld [vmem:[%s1 + $0x210] sm:$0xff]
    %v90 = vld [vmem:[%s1 + $0x218] sm:$0xff]
    %v91 = vld [vmem:[%s1 + $0x220] sm:$0xff]
    %v92 = vld [vmem:[%s1 + $0x228] sm:$0xff]
    %v93 = vld [vmem:[%s1 + $0x230] sm:$0xff]
    %v94 = vld [vmem:[%s1 + $0x238] sm:$0xff]
    %v95 = vld [vmem:[%s1 + $0x240] sm:$0xff]
    %v96 = vld [vmem:[%s1 + $0x248] sm:$0xff]
    %v97 = vld [vmem:[%s1 + $0x250] sm:$0xff]
    %v98 = vld [vmem:[%s1 + $0x258] sm:$0xff]
    %v99 = vld [vmem:[%s1 + $0x260] sm:$0xff]
    %v100 = vld [vmem:[%s1 + $0x268] sm:$0xff]
    %v101 = vld [vmem:[%s1 + $0x270] sm:$0xff]
    %v102 = vld [vmem:[%s1 + $0x278] sm:$0xff]
    %v103 = vld [vmem:[%s1 + $0x280] sm:$0xff]
    %v104 = vld [vmem:[%s1 + $0x288] sm:$0xff]
    %v105 = vld [vmem:[%s1 + $0x290] sm:$0xff]
    %v106 = vld [vmem:[%s1 + $0x298] sm:$0xff]
    %v107 = vld [vmem:[%s1 + $0x2a0] sm:$0xff]
    %v108 = vld [vmem:[%s1 + $0x2a8] sm:$0xff]
    %v109 = vld [vmem:[%s1 + $0x2b0] sm:$0xff]
    %v110 = vld [vmem:[%s1 + $0x2b8] sm:$0xff]
    %v111 = vld [vmem:[%s1 + $0x2c0] sm:$0xff]
    %v112 = vld [vmem:[%s1 + $0x2c8] sm:$0xff]
    %v113 = vld [vmem:[%s1 + $0x2d0] sm:$0xff]
    %v114 = vld [vmem:[%s1 + $0x2d8] sm:$0xff]
    %v115 = vld [vmem:[%s1 + $0x2e0] sm:$0xff]
    %v116 = vld [vmem:[%s1 + $0x2e8] sm:$0xff]
    %v117 = vld [vmem:[%s1 + $0x2f0] sm:$0xff]
    %v118 = vld [vmem:[%s1 + $0x2f8] sm:$0xff]
    %v119 = vld [vmem:[%s1 + $0x300] sm:$0xff]
    %v120 = vld [vmem:[%s1 + $0x308] sm:$0xff]
    %v121 = vld [vmem:[%s1 + $0x310] sm:$0xff]
    %v122 = vld [vmem:[%s1 + $0x318] sm:$0xff]
    %v123 = vld [vmem:[%s1 + $0x320] sm:$0xff]
    %v124 = vld [vmem:[%s1 + $0x328] sm:$0xff]
    %v125 = vld [vmem:[%s1 + $0x330] sm:$0xff]
    %v126 = vld [vmem:[%s1 + $0x338] sm:$0xff]
    %v127 = vld [vmem:[%s1 + $0x340] sm:$0xff]
    %v128 = vld [vmem:[%s1 + $0x348] sm:$0xff]
    %v129 = vld [vmem:[%s1 + $0x350] sm:$0xff]
    %v130 = vld [vmem:[%s1 + $0x358] sm:$0xff]
    %v131 = vld [vmem:[%s1 + $0x360] sm:$0xff]
    %v132 = vld [vmem:[%s1 + $0x368] sm:$0xff]
    %v133 = vld [vmem:[%s1 + $0x370] sm:$0xff]
    %v134 = vld [vmem:[%s1 + $0x378] sm:$0xff]
    %v135 = vld [vmem:[%s1 + $0x380] sm:$0xff]
    %v136 = vld [vmem:[%s1 + $0x388] sm:$0xff]
    %v137 = vld [vmem:[%s1 + $0x390] sm:$0xff]
    %v138 = vld [vmem:[%s1 + $0x398] sm:$0xff]
    %v139 = vld [vmem:[%s1 + $0x3a0] sm:$0xff]
    %v140 = vld [vmem:[%s1 + $0x3a8] sm:$0xff]
    %v141 = vld [vmem:[%s1 + $0x3b0] sm:$0xff]
    %v142 = vld [vmem:[%s1 + $0x3b8] sm:$0xff]
    %v143 = vld [vmem:[%s1 + $0x3c0] sm:$0xff]
    %v144 = vld [vmem:[%s1 + $0x3c8] sm:$0xff]
    %v145 = vld [vmem:[%s1 + $0x3d0] sm:$0xff]
    %v146 = vld [vmem:[%s1 + $0x3d8] sm:$0xff]
    %v147 = vld [vmem:[%s1 + $0x3e0] sm:$0xff]
    %v148 = vld [vmem:[%s1 + $0x3e8] sm:$0xff]
    %v149 = vld [vmem:[%s1 + $0x3f0] sm:$0xff]
    %v150 = vld [vmem:[%s1 + $0x3f8] sm:$0xff]
    %p151 = scmp.eq.s32.totalorder 0, 0
    // Predicated region
    $region14: #{dist_linear.1} parent=1 // pred_check
      %p152 = pneg %p151
    $region15: #{dist_linear.1} parent=1 // pred_check_branch
      %154 = sbr.rel (%p152) target = $region17
    $region16: #{dist_linear.1} parent=1 // pred_region
      %155 = vst [vmem:[#allocation2] sm:$0xff] 0.0
      %156 = vst [vmem:[#allocation2 + $0x8] sm:$0xff] 0.0
      %157 = vst [vmem:[#allocation2 + $0x10] sm:$0xff] 0.0
      %158 = vst [vmem:[#allocation2 + $0x18] sm:$0xff] 0.0
      %v159 = vlaneseq
      %vm160 = vcmp.ge.s32.totalorder %v159, 0
      %vm161 = vcmp.lt.s32.totalorder %v159, 256
      %vm162 = vmand %vm160, %vm161
      %163 = vst.msk [vmem:[#allocation4] sm:$0x3] %vm162, 0.0
    $region17: #{dist_linear.1} parent=1 // pred_fallthru
      _
    %p164 = scmp.eq.s32.totalorder 0, 0
    %p165 = pnand %p164, %p151
    %p166 = pneg %p165
    // Predicated region
    $region18: #{dist_linear.1} parent=1 // pred_check
      _
    $region19: #{dist_linear.1} parent=1 // pred_check_branch
      %168 = sbr.rel (%p165) target = $region21
    $region20: #{dist_linear.1} parent=1 // pred_region
      %vm169 = vcmask 7168
      %170 = vst.msk [vmem:[#allocation3] sm:$0xff] %vm169, 0.0
      %171 = vst.msk [vmem:[#allocation3 + $0x8] sm:$0xff] %vm169, 0.0
    $region21: #{dist_linear.1} parent=1 // pred_fallthru
      _
    %v172 = vld [vmem:[#allocation4] sm:$0x3]
    %v173 = vmul.f32 %v23, %v23
    %v174 = vmul.f32 %v24, %v24
    %v175 = vmul.f32 %v25, %v25
    %v176 = vmul.f32 %v26, %v26
    %v177 = vmul.f32 %v27, %v27
    %v178 = vmul.f32 %v28, %v28
    %v179 = vmul.f32 %v29, %v29
    %v180 = vmul.f32 %v30, %v30
    %v181 = vmul.f32 %v31, %v31
    %v182 = vmul.f32 %v32, %v32
    %v183 = vmul.f32 %v33, %v33
    %v184 = vmul.f32 %v34, %v34
    %v185 = vmul.f32 %v35, %v35
    %v186 = vmul.f32 %v36, %v36
    %v187 = vmul.f32 %v37, %v37
    %v188 = vmul.f32 %v38, %v38
    %v189 = vmul.f32 %v39, %v39
    %v190 = vmul.f32 %v40, %v40
    %v191 = vmul.f32 %v41, %v41
    %v192 = vmul.f32 %v42, %v42
    %v193 = vmul.f32 %v43, %v43
    %v194 = vmul.f32 %v44, %v44
    %v195 = vmul.f32 %v45, %v45
    %v196 = vmul.f32 %v46, %v46
    %v197 = vmul.f32 %v47, %v47
    %v198 = vmul.f32 %v48, %v48
    %v199 = vmul.f32 %v49, %v49
    %v200 = vmul.f32 %v50, %v50
    %v201 = vmul.f32 %v51, %v51
    %v202 = vmul.f32 %v52, %v52
    %v203 = vmul.f32 %v53, %v53
    %v204 = vmul.f32 %v54, %v54
    %v205 = vmul.f32 %v55, %v55
    %v206 = vmul.f32 %v56, %v56
    %v207 = vmul.f32 %v57, %v57
    %v208 = vmul.f32 %v58, %v58
    %v209 = vmul.f32 %v59, %v59
    %v210 = vmul.f32 %v60, %v60
    %v211 = vmul.f32 %v61, %v61
    %v212 = vmul.f32 %v62, %v62
    %v213 = vmul.f32 %v63, %v63
    %v214 = vmul.f32 %v64, %v64
    %v215 = vmul.f32 %v65, %v65
    %v216 = vmul.f32 %v66, %v66
    %v217 = vmul.f32 %v67, %v67
    %v218 = vmul.f32 %v68, %v68
    %v219 = vmul.f32 %v69, %v69
    %v220 = vmul.f32 %v70, %v70
    %v221 = vmul.f32 %v71, %v71
    %v222 = vmul.f32 %v72, %v72
    %v223 = vmul.f32 %v73, %v73
    %v224 = vmul.f32 %v74, %v74
    %v225 = vmul.f32 %v75, %v75
    %v226 = vmul.f32 %v76, %v76
    %v227 = vmul.f32 %v77, %v77
    %v228 = vmul.f32 %v78, %v78
    %v229 = vmul.f32 %v79, %v79
    %v230 = vmul.f32 %v80, %v80
    %v231 = vmul.f32 %v81, %v81
    %v232 = vmul.f32 %v82, %v82
    %v233 = vmul.f32 %v83, %v83
    %v234 = vmul.f32 %v84, %v84
    %v235 = vmul.f32 %v85, %v85
    %v236 = vmul.f32 %v86, %v86
    %v237 = vmul.f32 %v87, %v87
    %v238 = vmul.f32 %v88, %v88
    %v239 = vmul.f32 %v89, %v89
    %v240 = vmul.f32 %v90, %v90
    %v241 = vmul.f32 %v91, %v91
    %v242 = vmul.f32 %v92, %v92
    %v243 = vmul.f32 %v93, %v93
    %v244 = vmul.f32 %v94, %v94
    %v245 = vmul.f32 %v95, %v95
    %v246 = vmul.f32 %v96, %v96
    %v247 = vmul.f32 %v97, %v97
    %v248 = vmul.f32 %v98, %v98
    %v249 = vmul.f32 %v99, %v99
    %v250 = vmul.f32 %v100, %v100
    %v251 = vmul.f32 %v101, %v101
    %v252 = vmul.f32 %v102, %v102
    %v253 = vmul.f32 %v103, %v103
    %v254 = vmul.f32 %v104, %v104
    %v255 = vmul.f32 %v105, %v105
    %v256 = vmul.f32 %v106, %v106
    %v257 = vmul.f32 %v107, %v107
    %v258 = vmul.f32 %v108, %v108
    %v259 = vmul.f32 %v109, %v109
    %v260 = vmul.f32 %v110, %v110
    %v261 = vmul.f32 %v111, %v111
    %v262 = vmul.f32 %v112, %v112
    %v263 = vmul.f32 %v113, %v113
    %v264 = vmul.f32 %v114, %v114
    %v265 = vmul.f32 %v115, %v115
    %v266 = vmul.f32 %v116, %v116
    %v267 = vmul.f32 %v117, %v117
    %v268 = vmul.f32 %v118, %v118
    %v269 = vmul.f32 %v119, %v119
    %v270 = vmul.f32 %v120, %v120
    %v271 = vmul.f32 %v121, %v121
    %v272 = vmul.f32 %v122, %v122
    %v273 = vmul.f32 %v123, %v123
    %v274 = vmul.f32 %v124, %v124
    %v275 = vmul.f32 %v125, %v125
    %v276 = vmul.f32 %v126, %v126
    %v277 = vmul.f32 %v127, %v127
    %v278 = vmul.f32 %v128, %v128
    %v279 = vmul.f32 %v129, %v129
    %v280 = vmul.f32 %v130, %v130
    %v281 = vmul.f32 %v131, %v131
    %v282 = vmul.f32 %v132, %v132
    %v283 = vmul.f32 %v133, %v133
    %v284 = vmul.f32 %v134, %v134
    %v285 = vmul.f32 %v135, %v135
    %v286 = vmul.f32 %v136, %v136
    %v287 = vmul.f32 %v137, %v137
    %v288 = vmul.f32 %v138, %v138
    %v289 = vmul.f32 %v139, %v139
    %v290 = vmul.f32 %v140, %v140
    %v291 = vmul.f32 %v141, %v141
    %v292 = vmul.f32 %v142, %v142
    %v293 = vmul.f32 %v143, %v143
    %v294 = vmul.f32 %v144, %v144
    %v295 = vmul.f32 %v145, %v145
    %v296 = vmul.f32 %v146, %v146
    %v297 = vmul.f32 %v147, %v147
    %v298 = vmul.f32 %v148, %v148
    %v299 = vmul.f32 %v149, %v149
    %v300 = vmul.f32 %v150, %v150
    %v301 = vadd.f32 %v173, %v174
    %v302 = vadd.f32 %v301, %v175
    %v303 = vadd.f32 %v302, %v176
    %304 = vadd.xlane.f32.xlu0 %v303
    %v305 = vpop.xlane.xlu0 %304
    %v306 = vadd.f32 %v177, %v178
    %v307 = vadd.f32 %v306, %v179
    %v308 = vadd.f32 %v307, %v180
    %309 = vadd.xlane.f32.xlu0 %v308
    %v310 = vpop.xlane.xlu0 %309
    %v311 = vadd.f32 %v181, %v182
    %v312 = vadd.f32 %v311, %v183
    %v313 = vadd.f32 %v312, %v184
    %314 = vadd.xlane.f32.xlu0 %v313
    %v315 = vpop.xlane.xlu0 %314
    %v316 = vadd.f32 %v185, %v186
    %v317 = vadd.f32 %v316, %v187
    %v318 = vadd.f32 %v317, %v188
    %319 = vadd.xlane.f32.xlu0 %v318
    %v320 = vpop.xlane.xlu0 %319
    %v321 = vadd.f32 %v189, %v190
    %v322 = vadd.f32 %v321, %v191
    %v323 = vadd.f32 %v322, %v192
    %324 = vadd.xlane.f32.xlu0 %v323
    %v325 = vpop.xlane.xlu0 %324
    %v326 = vadd.f32 %v193, %v194
    %v327 = vadd.f32 %v326, %v195
    %v328 = vadd.f32 %v327, %v196
    %329 = vadd.xlane.f32.xlu0 %v328
    %v330 = vpop.xlane.xlu0 %329
    %v331 = vadd.f32 %v197, %v198
    %v332 = vadd.f32 %v331, %v199
    %v333 = vadd.f32 %v332, %v200
    %334 = vadd.xlane.f32.xlu0 %v333
    %v335 = vpop.xlane.xlu0 %334
    %v336 = vadd.f32 %v201, %v202
    %v337 = vadd.f32 %v336, %v203
    %v338 = vadd.f32 %v337, %v204
    %339 = vadd.xlane.f32.xlu0 %v338
    %v340 = vpop.xlane.xlu0 %339
    %v341 = vadd.f32 %v205, %v206
    %v342 = vadd.f32 %v341, %v207
    %v343 = vadd.f32 %v342, %v208
    %344 = vadd.xlane.f32.xlu0 %v343
    %v345 = vpop.xlane.xlu0 %344
    %v346 = vadd.f32 %v209, %v210
    %v347 = vadd.f32 %v346, %v211
    %v348 = vadd.f32 %v347, %v212
    %349 = vadd.xlane.f32.xlu0 %v348
    %v350 = vpop.xlane.xlu0 %349
    %v351 = vadd.f32 %v213, %v214
    %v352 = vadd.f32 %v351, %v215
    %v353 = vadd.f32 %v352, %v216
    %354 = vadd.xlane.f32.xlu0 %v353
    %v355 = vpop.xlane.xlu0 %354
    %v356 = vadd.f32 %v217, %v218
    %v357 = vadd.f32 %v356, %v219
    %v358 = vadd.f32 %v357, %v220
    %359 = vadd.xlane.f32.xlu0 %v358
    %v360 = vpop.xlane.xlu0 %359
    %v361 = vadd.f32 %v221, %v222
    %v362 = vadd.f32 %v361, %v223
    %v363 = vadd.f32 %v362, %v224
    %364 = vadd.xlane.f32.xlu0 %v363
    %v365 = vpop.xlane.xlu0 %364
    %v366 = vadd.f32 %v225, %v226
    %v367 = vadd.f32 %v366, %v227
    %v368 = vadd.f32 %v367, %v228
    %369 = vadd.xlane.f32.xlu0 %v368
    %v370 = vpop.xlane.xlu0 %369
    %v371 = vadd.f32 %v229, %v230
    %v372 = vadd.f32 %v371, %v231
    %v373 = vadd.f32 %v372, %v232
    %374 = vadd.xlane.f32.xlu0 %v373
    %v375 = vpop.xlane.xlu0 %374
    %v376 = vadd.f32 %v233, %v234
    %v377 = vadd.f32 %v376, %v235
    %v378 = vadd.f32 %v377, %v236
    %379 = vadd.xlane.f32.xlu0 %v378
    %v380 = vpop.xlane.xlu0 %379
    %v381 = vadd.f32 %v237, %v238
    %v382 = vadd.f32 %v381, %v239
    %v383 = vadd.f32 %v382, %v240
    %384 = vadd.xlane.f32.xlu0 %v383
    %v385 = vpop.xlane.xlu0 %384
    %v386 = vadd.f32 %v241, %v242
    %v387 = vadd.f32 %v386, %v243
    %v388 = vadd.f32 %v387, %v244
    %389 = vadd.xlane.f32.xlu0 %v388
    %v390 = vpop.xlane.xlu0 %389
    %v391 = vadd.f32 %v245, %v246
    %v392 = vadd.f32 %v391, %v247
    %v393 = vadd.f32 %v392, %v248
    %394 = vadd.xlane.f32.xlu0 %v393
    %v395 = vpop.xlane.xlu0 %394
    %v396 = vadd.f32 %v249, %v250
    %v397 = vadd.f32 %v396, %v251
    %v398 = vadd.f32 %v397, %v252
    %399 = vadd.xlane.f32.xlu0 %v398
    %v400 = vpop.xlane.xlu0 %399
    %v401 = vadd.f32 %v253, %v254
    %v402 = vadd.f32 %v401, %v255
    %v403 = vadd.f32 %v402, %v256
    %404 = vadd.xlane.f32.xlu0 %v403
    %v405 = vpop.xlane.xlu0 %404
    %v406 = vadd.f32 %v257, %v258
    %v407 = vadd.f32 %v406, %v259
    %v408 = vadd.f32 %v407, %v260
    %409 = vadd.xlane.f32.xlu0 %v408
    %v410 = vpop.xlane.xlu0 %409
    %v411 = vadd.f32 %v261, %v262
    %v412 = vadd.f32 %v411, %v263
    %v413 = vadd.f32 %v412, %v264
    %414 = vadd.xlane.f32.xlu0 %v413
    %v415 = vpop.xlane.xlu0 %414
    %v416 = vadd.f32 %v265, %v266
    %v417 = vadd.f32 %v416, %v267
    %v418 = vadd.f32 %v417, %v268
    %419 = vadd.xlane.f32.xlu0 %v418
    %v420 = vpop.xlane.xlu0 %419
    %v421 = vadd.f32 %v269, %v270
    %v422 = vadd.f32 %v421, %v271
    %v423 = vadd.f32 %v422, %v272
    %424 = vadd.xlane.f32.xlu0 %v423
    %v425 = vpop.xlane.xlu0 %424
    %v426 = vadd.f32 %v273, %v274
    %v427 = vadd.f32 %v426, %v275
    %v428 = vadd.f32 %v427, %v276
    %429 = vadd.xlane.f32.xlu0 %v428
    %v430 = vpop.xlane.xlu0 %429
    %v431 = vadd.f32 %v277, %v278
    %v432 = vadd.f32 %v431, %v279
    %v433 = vadd.f32 %v432, %v280
    %434 = vadd.xlane.f32.xlu0 %v433
    %v435 = vpop.xlane.xlu0 %434
    %v436 = vadd.f32 %v281, %v282
    %v437 = vadd.f32 %v436, %v283
    %v438 = vadd.f32 %v437, %v284
    %439 = vadd.xlane.f32.xlu0 %v438
    %v440 = vpop.xlane.xlu0 %439
    %v441 = vadd.f32 %v285, %v286
    %v442 = vadd.f32 %v441, %v287
    %v443 = vadd.f32 %v442, %v288
    %444 = vadd.xlane.f32.xlu0 %v443
    %v445 = vpop.xlane.xlu0 %444
    %v446 = vadd.f32 %v289, %v290
    %v447 = vadd.f32 %v446, %v291
    %v448 = vadd.f32 %v447, %v292
    %449 = vadd.xlane.f32.xlu0 %v448
    %v450 = vpop.xlane.xlu0 %449
    %v451 = vadd.f32 %v293, %v294
    %v452 = vadd.f32 %v451, %v295
    %v453 = vadd.f32 %v452, %v296
    %454 = vadd.xlane.f32.xlu0 %v453
    %v455 = vpop.xlane.xlu0 %454
    %v456 = vadd.f32 %v297, %v298
    %v457 = vadd.f32 %v456, %v299
    %v458 = vadd.f32 %v457, %v300
    %459 = vadd.xlane.f32.xlu0 %v458
    %v460 = vpop.xlane.xlu0 %459
    %461 = vxpose.xlu0.b32.start [1/16] %v305, 128
    %462 = vxpose.xlu0.b32.cont [2/16] %v310, 128
    %463 = vxpose.xlu0.b32.cont [3/16] %v315, 128
    %464 = vxpose.xlu0.b32.cont [4/16] %v320, 128
    %465 = vxpose.xlu0.b32.cont [5/16] %v325, 128
    %466 = vxpose.xlu0.b32.cont [6/16] %v330, 128
    %467 = vxpose.xlu0.b32.cont [7/16] %v335, 128
    %468 = vxpose.xlu0.b32.cont [8/16] %v340, 128
    %469 = vxpose.xlu0.b32.cont [9/16] %v345, 128
    %470 = vxpose.xlu0.b32.cont [10/16] %v350, 128
    %471 = vxpose.xlu0.b32.cont [11/16] %v355, 128
    %472 = vxpose.xlu0.b32.cont [12/16] %v360, 128
    %473 = vxpose.xlu0.b32.cont [13/16] %v365, 128
    %474 = vxpose.xlu0.b32.cont [14/16] %v370, 128
    %475 = vxpose.xlu0.b32.cont [15/16] %v375, 128
    %476 = vxpose.xlu0.b32.end [16/16] %v380, 128
    %v477 = vpop.trf.xlu0
    %v478 = vpop.trf.xlu0
    %v479 = vpop.trf.xlu0
    %v480 = vpop.trf.xlu0
    %v481 = vpop.trf.xlu0
    %v482 = vpop.trf.xlu0
    %v483 = vpop.trf.xlu0
    %v484 = vpop.trf.xlu0
    %v485 = vpop.trf.xlu0
    %v486 = vpop.trf.xlu0
    %v487 = vpop.trf.xlu0
    %v488 = vpop.trf.xlu0
    %v489 = vpop.trf.xlu0
    %v490 = vpop.trf.xlu0
    %v491 = vpop.trf.xlu0
    %v492 = vpop.trf.xlu0
    %493 = vxpose.xlu0.b32.start [1/16] %v385, 128
    %494 = vxpose.xlu0.b32.cont [2/16] %v390, 128
    %495 = vxpose.xlu0.b32.cont [3/16] %v395, 128
    %496 = vxpose.xlu0.b32.cont [4/16] %v400, 128
    %497 = vxpose.xlu0.b32.cont [5/16] %v405, 128
    %498 = vxpose.xlu0.b32.cont [6/16] %v410, 128
    %499 = vxpose.xlu0.b32.cont [7/16] %v415, 128
    %500 = vxpose.xlu0.b32.cont [8/16] %v420, 128
    %501 = vxpose.xlu0.b32.cont [9/16] %v425, 128
    %502 = vxpose.xlu0.b32.cont [10/16] %v430, 128
    %503 = vxpose.xlu0.b32.cont [11/16] %v435, 128
    %504 = vxpose.xlu0.b32.cont [12/16] %v440, 128
    %505 = vxpose.xlu0.b32.cont [13/16] %v445, 128
    %506 = vxpose.xlu0.b32.cont [14/16] %v450, 128
    %507 = vxpose.xlu0.b32.cont [15/16] %v455, 128
    %508 = vxpose.xlu0.b32.end [16/16] %v460, 128
    %v509 = vpop.trf.xlu0
    %v510 = vpop.trf.xlu0
    %v511 = vpop.trf.xlu0
    %v512 = vpop.trf.xlu0
    %v513 = vpop.trf.xlu0
    %v514 = vpop.trf.xlu0
    %v515 = vpop.trf.xlu0
    %v516 = vpop.trf.xlu0
    %v517 = vpop.trf.xlu0
    %v518 = vpop.trf.xlu0
    %v519 = vpop.trf.xlu0
    %v520 = vpop.trf.xlu0
    %v521 = vpop.trf.xlu0
    %v522 = vpop.trf.xlu0
    %v523 = vpop.trf.xlu0
    %v524 = vpop.trf.xlu0
    %v527 = vrot.slane %v509, 7
    %vm528 = vcmask 1040384
    %v529 = vsel %vm528, %v477, %v527
    %v531 = vadd.f32 %v172, %v529
    %v532 = vlaneseq
    %vm533 = vcmp.ge.s32.totalorder %v532, 0
    %vm534 = vcmp.lt.s32.totalorder %v532, 256
    %vm535 = vmand %vm533, %vm534
    %536 = vst.msk [vmem:[#allocation4] sm:$0x3] %vm535, %v531
    // Predicated region
    $region22: #{dist_linear.1} parent=1 // pred_check
      %p537 = pneg %p164
    $region23: #{dist_linear.1} parent=1 // pred_check_branch
      %539 = sbr.rel (%p537) target = $region25
    $region24: #{dist_linear.1} parent=1 // pred_region
      %v540 = vld [vmem:[#allocation3] sm:$0xff]
      %v541 = vld [vmem:[#allocation3 + $0x8] sm:$0xff]
      %v542 = vmul.f32 %v15, %v15
      %v543 = vmul.f32 %v16, %v16
      %v544 = vmul.f32 %v17, %v17
      %v545 = vmul.f32 %v18, %v18
      %v546 = vmul.f32 %v19, %v19
      %v547 = vmul.f32 %v20, %v20
      %v548 = vmul.f32 %v21, %v21
      %v549 = vmul.f32 %v22, %v22
      %v550 = vadd.f32 %v542, %v543
      %v551 = vadd.f32 %v550, %v544
      %v552 = vadd.f32 %v551, %v545
      %553 = vadd.xlane.f32.xlu0 %v552
      %v554 = vpop.xlane.xlu0 %553
      %v555 = vadd.f32 %v546, %v547
      %v556 = vadd.f32 %v555, %v548
      %v557 = vadd.f32 %v556, %v549
      %558 = vadd.xlane.f32.xlu0 %v557
      %v559 = vpop.xlane.xlu0 %558
      %v560 = vadd.f32 %v540, %v554
      %v561 = vadd.f32 %v541, %v559
      %vm562 = vcmask 7168
      %563 = vst.msk [vmem:[#allocation3] sm:$0xff] %vm562, %v560
      %564 = vst.msk [vmem:[#allocation3 + $0x8] sm:$0xff] %vm562, %v561
    $region25: #{dist_linear.1} parent=1 // pred_fallthru
      _
    %v565 = vld [vmem:[#allocation2] sm:$0xff]
    %v566 = vld [vmem:[#allocation2 + $0x8] sm:$0xff]
    %v567 = vld [vmem:[#allocation2 + $0x10] sm:$0xff]
    %v568 = vld [vmem:[#allocation2 + $0x18] sm:$0xff]
    %v569 = vpack.c.bf16 %v19, %v15
    %v570 = vpack.c.bf16 %v20, %v16
    %v571 = vpack.c.bf16 %v21, %v17
    %v572 = vpack.c.bf16 %v22, %v18
    %v573 = vpack.c.bf16 %v27, %v23
    %v574 = vpack.c.bf16 %v28, %v24
    %v575 = vpack.c.bf16 %v29, %v25
    %v576 = vpack.c.bf16 %v30, %v26
    %v577 = vpack.c.bf16 %v35, %v31
    %v578 = vpack.c.bf16 %v36, %v32
    %v579 = vpack.c.bf16 %v37, %v33
    %v580 = vpack.c.bf16 %v38, %v34
    %v581 = vpack.c.bf16 %v43, %v39
    %v582 = vpack.c.bf16 %v44, %v40
    %v583 = vpack.c.bf16 %v45, %v41
    %v584 = vpack.c.bf16 %v46, %v42
    %v585 = vpack.c.bf16 %v51, %v47
    %v586 = vpack.c.bf16 %v52, %v48
    %v587 = vpack.c.bf16 %v53, %v49
    %v588 = vpack.c.bf16 %v54, %v50
    %v589 = vpack.c.bf16 %v59, %v55
    %v590 = vpack.c.bf16 %v60, %v56
    %v591 = vpack.c.bf16 %v61, %v57
    %v592 = vpack.c.bf16 %v62, %v58
    %v593 = vpack.c.bf16 %v67, %v63
    %v594 = vpack.c.bf16 %v68, %v64
    %v595 = vpack.c.bf16 %v69, %v65
    %v596 = vpack.c.bf16 %v70, %v66
    %v597 = vpack.c.bf16 %v75, %v71
    %v598 = vpack.c.bf16 %v76, %v72
    %v599 = vpack.c.bf16 %v77, %v73
    %v600 = vpack.c.bf16 %v78, %v74
    %v601 = vpack.c.bf16 %v83, %v79
    %v602 = vpack.c.bf16 %v84, %v80
    %v603 = vpack.c.bf16 %v85, %v81
    %v604 = vpack.c.bf16 %v86, %v82
    %v605 = vpack.c.bf16 %v91, %v87
    %v606 = vpack.c.bf16 %v92, %v88
    %v607 = vpack.c.bf16 %v93, %v89
    %v608 = vpack.c.bf16 %v94, %v90
    %v609 = vpack.c.bf16 %v99, %v95
    %v610 = vpack.c.bf16 %v100, %v96
    %v611 = vpack.c.bf16 %v101, %v97
    %v612 = vpack.c.bf16 %v102, %v98
    %v613 = vpack.c.bf16 %v107, %v103
    %v614 = vpack.c.bf16 %v108, %v104
    %v615 = vpack.c.bf16 %v109, %v105
    %v616 = vpack.c.bf16 %v110, %v106
    %v617 = vpack.c.bf16 %v115, %v111
    %v618 = vpack.c.bf16 %v116, %v112
    %v619 = vpack.c.bf16 %v117, %v113
    %v620 = vpack.c.bf16 %v118, %v114
    %v621 = vpack.c.bf16 %v123, %v119
    %v622 = vpack.c.bf16 %v124, %v120
    %v623 = vpack.c.bf16 %v125, %v121
    %v624 = vpack.c.bf16 %v126, %v122
    %v625 = vpack.c.bf16 %v131, %v127
    %v626 = vpack.c.bf16 %v132, %v128
    %v627 = vpack.c.bf16 %v133, %v129
    %v628 = vpack.c.bf16 %v134, %v130
    %v629 = vpack.c.bf16 %v139, %v135
    %v630 = vpack.c.bf16 %v140, %v136
    %v631 = vpack.c.bf16 %v141, %v137
    %v632 = vpack.c.bf16 %v142, %v138
    %v633 = vpack.c.bf16 %v147, %v143
    %v634 = vpack.c.bf16 %v148, %v144
    %v635 = vpack.c.bf16 %v149, %v145
    %v636 = vpack.c.bf16 %v150, %v146
    %637 = vmatpush.bf16.xpose.msra.mxu0 %v601
    %638 = vmatpush.bf16.xpose.msra.mxu0 %v597
    %639 = vmatpush.bf16.xpose.msra.mxu0 %v593
    %640 = vmatpush.bf16.xpose.msra.mxu0 %v589
    %641 = vmatpush.bf16.xpose.msra.mxu0 %v585
    %642 = vmatpush.bf16.xpose.msra.mxu0 %v581
    %643 = vmatpush.bf16.xpose.msra.mxu0 %v577
    %644 = vmatpush.bf16.xpose.msra.mxu0 %v573
    %645 = vmatmul.bf16.gmra.mxu0 %v569
    %v646 = vpop.f32.mrf.mxu0
    %v647 = vadd.f32 0.0, %v646
    %v648 = vpop.f32.mrf.mxu0
    %v649 = vadd.f32 0.0, %v648
    %650 = vdwg.mxu0
    %651 = vmatpush.bf16.xpose.msra.mxu0 %v602
    %652 = vmatpush.bf16.xpose.msra.mxu0 %v598
    %653 = vmatpush.bf16.xpose.msra.mxu0 %v594
    %654 = vmatpush.bf16.xpose.msra.mxu0 %v590
    %655 = vmatpush.bf16.xpose.msra.mxu0 %v586
    %656 = vmatpush.bf16.xpose.msra.mxu0 %v582
    %657 = vmatpush.bf16.xpose.msra.mxu0 %v578
    %658 = vmatpush.bf16.xpose.msra.mxu0 %v574
    %659 = vmatmul.bf16.gmra.mxu0 %v570
    %v660 = vpop.f32.mrf.mxu0
    %v661 = vadd.f32 %v647, %v660
    %v662 = vpop.f32.mrf.mxu0
    %v663 = vadd.f32 %v649, %v662
    %664 = vdwg.mxu0
    %665 = vmatpush.bf16.xpose.msra.mxu0 %v603
    %666 = vmatpush.bf16.xpose.msra.mxu0 %v599
    %667 = vmatpush.bf16.xpose.msra.mxu0 %v595
    %668 = vmatpush.bf16.xpose.msra.mxu0 %v591
    %669 = vmatpush.bf16.xpose.msra.mxu0 %v587
    %670 = vmatpush.bf16.xpose.msra.mxu0 %v583
    %671 = vmatpush.bf16.xpose.msra.mxu0 %v579
    %672 = vmatpush.bf16.xpose.msra.mxu0 %v575
    %673 = vmatmul.bf16.gmra.mxu0 %v571
    %v674 = vpop.f32.mrf.mxu0
    %v675 = vadd.f32 %v661, %v674
    %v676 = vpop.f32.mrf.mxu0
    %v677 = vadd.f32 %v663, %v676
    %678 = vdwg.mxu0
    %679 = vmatpush.bf16.xpose.msra.mxu0 %v604
    %680 = vmatpush.bf16.xpose.msra.mxu0 %v600
    %681 = vmatpush.bf16.xpose.msra.mxu0 %v596
    %682 = vmatpush.bf16.xpose.msra.mxu0 %v592
    %683 = vmatpush.bf16.xpose.msra.mxu0 %v588
    %684 = vmatpush.bf16.xpose.msra.mxu0 %v584
    %685 = vmatpush.bf16.xpose.msra.mxu0 %v580
    %686 = vmatpush.bf16.xpose.msra.mxu0 %v576
    %687 = vmatmul.bf16.gmra.mxu0 %v572
    %v688 = vpop.f32.mrf.mxu0
    %v689 = vadd.f32 %v675, %v688
    %v690 = vpop.f32.mrf.mxu0
    %v691 = vadd.f32 %v677, %v690
    %692 = vdwg.mxu0
    %693 = vmatpush.bf16.xpose.msra.mxu0 %v633
    %694 = vmatpush.bf16.xpose.msra.mxu0 %v629
    %695 = vmatpush.bf16.xpose.msra.mxu0 %v625
    %696 = vmatpush.bf16.xpose.msra.mxu0 %v621
    %697 = vmatpush.bf16.xpose.msra.mxu0 %v617
    %698 = vmatpush.bf16.xpose.msra.mxu0 %v613
    %699 = vmatpush.bf16.xpose.msra.mxu0 %v609
    %700 = vmatpush.bf16.xpose.msra.mxu0 %v605
    %701 = vmatmul.bf16.gmra.mxu0 %v569
    %v702 = vpop.f32.mrf.mxu0
    %v703 = vadd.f32 0.0, %v702
    %v704 = vpop.f32.mrf.mxu0
    %v705 = vadd.f32 0.0, %v704
    %706 = vdwg.mxu0
    %707 = vmatpush.bf16.xpose.msra.mxu0 %v634
    %708 = vmatpush.bf16.xpose.msra.mxu0 %v630
    %709 = vmatpush.bf16.xpose.msra.mxu0 %v626
    %710 = vmatpush.bf16.xpose.msra.mxu0 %v622
    %711 = vmatpush.bf16.xpose.msra.mxu0 %v618
    %712 = vmatpush.bf16.xpose.msra.mxu0 %v614
    %713 = vmatpush.bf16.xpose.msra.mxu0 %v610
    %714 = vmatpush.bf16.xpose.msra.mxu0 %v606
    %715 = vmatmul.bf16.gmra.mxu0 %v570
    %v716 = vpop.f32.mrf.mxu0
    %v717 = vadd.f32 %v703, %v716
    %v718 = vpop.f32.mrf.mxu0
    %v719 = vadd.f32 %v705, %v718
    %720 = vdwg.mxu0
    %721 = vmatpush.bf16.xpose.msra.mxu0 %v635
    %722 = vmatpush.bf16.xpose.msra.mxu0 %v631
    %723 = vmatpush.bf16.xpose.msra.mxu0 %v627
    %724 = vmatpush.bf16.xpose.msra.mxu0 %v623
    %725 = vmatpush.bf16.xpose.msra.mxu0 %v619
    %726 = vmatpush.bf16.xpose.msra.mxu0 %v615
    %727 = vmatpush.bf16.xpose.msra.mxu0 %v611
    %728 = vmatpush.bf16.xpose.msra.mxu0 %v607
    %729 = vmatmul.bf16.gmra.mxu0 %v571
    %v730 = vpop.f32.mrf.mxu0
    %v731 = vadd.f32 %v717, %v730
    %v732 = vpop.f32.mrf.mxu0
    %v733 = vadd.f32 %v719, %v732
    %734 = vdwg.mxu0
    %735 = vmatpush.bf16.xpose.msra.mxu0 %v636
    %736 = vmatpush.bf16.xpose.msra.mxu0 %v632
    %737 = vmatpush.bf16.xpose.msra.mxu0 %v628
    %738 = vmatpush.bf16.xpose.msra.mxu0 %v624
    %739 = vmatpush.bf16.xpose.msra.mxu0 %v620
    %740 = vmatpush.bf16.xpose.msra.mxu0 %v616
    %741 = vmatpush.bf16.xpose.msra.mxu0 %v612
    %742 = vmatpush.bf16.xpose.msra.mxu0 %v608
    %743 = vmatmul.bf16.gmra.mxu0 %v572
    %v744 = vpop.f32.mrf.mxu0
    %v745 = vadd.f32 %v731, %v744
    %v746 = vpop.f32.mrf.mxu0
    %v747 = vadd.f32 %v733, %v746
    %748 = vdwg.mxu0
    %v749 = vadd.f32 %v565, %v689
    %v750 = vadd.f32 %v566, %v745
    %v751 = vadd.f32 %v567, %v691
    %v752 = vadd.f32 %v568, %v747
    %753 = vst [vmem:[#allocation2] sm:$0xff] %v749
    %754 = vst [vmem:[#allocation2 + $0x8] sm:$0xff] %v750
    %755 = vst [vmem:[#allocation2 + $0x10] sm:$0xff] %v751
    %756 = vst [vmem:[#allocation2 + $0x18] sm:$0xff] %v752
    // Predicated region
    $region26: #{dist_linear.1} parent=1 // pred_check
      %p757 = pneg %p151
    $region27: #{dist_linear.1} parent=1 // pred_check_branch
      %759 = sbr.rel (%p757) target = $region29
    $region28: #{dist_linear.1} parent=1 // pred_region
      %v760 = vld [vmem:[%s2] sm:$0x3]
      %v761 = vld [vmem:[#allocation3] sm:$0xff]
      %v762 = vld [vmem:[#allocation3 + $0x8] sm:$0xff]
      %v763 = vrsqrt.pop %v761
      %v764 = vmul.f32 %v763, %v761
      %v765 = vmul.f32 %v764, %v763
      %v766 = vmul.f32 0.5, %v765
      %v767 = vsub.f32 1.5, %v766
      %v768 = vmul.f32 %v763, %v767
      %v769 = vmul.f32 %v761, %v768
      %vm770 = vcmp.eq.f32.partialorder %v761, inf
      %v771 = vsel %vm770, %v761, %v769
      %vm772 = vcmp.eq.f32.partialorder %v761, 0.0
      %v773 = vand.u32 %v761, 2147483648
      %v774 = vsel %vm772, %v773, %v771
      %v775 = vrsqrt.pop %v762
      %v776 = vmul.f32 %v775, %v762
      %v777 = vmul.f32 %v776, %v775
      %v778 = vmul.f32 0.5, %v777
      %v779 = vsub.f32 1.5, %v778
      %v780 = vmul.f32 %v775, %v779
      %v781 = vmul.f32 %v762, %v780
      %vm782 = vcmp.eq.f32.partialorder %v762, inf
      %v783 = vsel %vm782, %v762, %v781
      %vm784 = vcmp.eq.f32.partialorder %v762, 0.0
      %v785 = vand.u32 %v762, 2147483648
      %v786 = vsel %vm784, %v785, %v783
      %v787 = vadd.f32 %v774, 1e-05
      %v788 = vadd.f32 %v786, 1e-05
      %v789 = vrcp.pop %v787
      %v790 = vrcp.pop %v788
      %v791 = vmul.f32 %v789, 2.0
      %v792 = vmul.f32 %v790, 2.0
      %v793 = vld [vmem:[#allocation4] sm:$0x3]
      %vm794 = vcmp.gt.f32.partialorder %v793, 0.0
      %v795 = vmax.f32 %v793, 1e-30
      %v796 = vrsqrt.pop %v795
      %v797 = vmul.f32 %v796, %v795
      %v798 = vmul.f32 %v797, %v796
      %v799 = vmul.f32 0.5, %v798
      %v800 = vsub.f32 1.5, %v799
      %v801 = vmul.f32 %v796, %v800
      %vm802 = vweird.f32 %v795
      %vm803 = vweird.f32 %v796
      %vm804 = vmor %vm802, %vm803
      %v805 = vsel %vm804, %v796, %v801
      %v806 = vmul.f32 %v760, %v805
      %v807 = vsel %vm794, %v806, 0.0
      %v808 = vld [vmem:[#allocation2] sm:$0xff]
      %v809 = vld [vmem:[#allocation2 + $0x8] sm:$0xff]
      %v810 = vld [vmem:[#allocation2 + $0x10] sm:$0xff]
      %v811 = vld [vmem:[#allocation2 + $0x18] sm:$0xff]
      %813 = vset.pattern.permute.xlu0 0
      %814 = vperm.xlu0 %813, %v791
      %v815 = vpop.permute.xlu0 %814
      %818 = vset.pattern.permute.xlu0 0
      %819 = vperm.xlu0 %818, %v792
      %v820 = vpop.permute.xlu0 %819
      %v822 = vmul.f32 %v808, %v815
      %v823 = vmul.f32 %v809, %v815
      %v824 = vmul.f32 %v810, %v820
      %v825 = vmul.f32 %v811, %v820
      %v827 = vperm.slane %v807, 0
      %v828 = vperm.slane %v807, 1
      %v831 = vmul.f32 %v822, %v827
      %v832 = vmul.f32 %v823, %v828
      %v833 = vmul.f32 %v824, %v827
      %v834 = vmul.f32 %v825, %v828
      %835 = vst [vmem:[#allocation5] sm:$0xff] %v831
      %836 = vst [vmem:[#allocation5 + $0x8] sm:$0xff] %v832
      %837 = vst [vmem:[#allocation5 + $0x10] sm:$0xff] %v833
      %838 = vst [vmem:[#allocation5 + $0x18] sm:$0xff] %v834
    $region29: #{dist_linear.1} parent=1 // pred_fallthru
      _
    // Predicated region
    $region30: #{dist_linear.1} parent=1 // pred_check
      _
    $region31: #{dist_linear.1} parent=1 // pred_check_branch
      %840 = sbr.rel (0) target = $region33
    $region32: #{dist_linear.1} parent=1 // pred_region
      %842 = vsyncadd [#allocation6], 0
      %s843 = sshll.u32 [#allocation5], 4
      %s844 = int_to_ptr.vmem [resolvable:$true] %s843
      %s845 = sshll.u32 %s3, 4
      %s846 = int_to_ptr.hbm [resolvable:$true] %s845
      %851 = dma.vmem_to_hbm [thread:$0]  %s844, 512, %s846, [#allocation6], 256, 256, 16
    $region33: #{dist_linear.1} parent=1 // pred_fallthru
      _
    // Predicated region
    $region34: #{dist_linear.1} parent=1 // pred_check
      _
    $region35: #{dist_linear.1} parent=1 // pred_check_branch
      %853 = sbr.rel (0) target = $region37
    $region36: #{dist_linear.1} parent=1 // pred_region
      %855 = dma.done [#allocation6], 512
    $region37: #{dist_linear.1} parent=1 // pred_fallthru
      _
    %856 = vsyncpa [#allocation6], 1

</llo_original>
